<compile_context>
chip_gen: v5e
topology: v5e:2x2
jax: 0.10.0
libtpu: 0.0.40
codegen_flags: <defaults>
</compile_context>

<pallas_src>
import jax
import jax.numpy as jnp
from jax import lax
from jax.experimental import pallas as pl
from jax.experimental.pallas import tpu as pltpu

# ---- model hyper-params (consistent with the module __init__) ----
N = 2
C_IN, H, W = 4, 16, 16          # input_dim = (C, H, W)
CONV_DIM = 8                    # convolutionalDims = (8,)
HIDDEN = 32                     # hiddenDims = (32,)
NUM_CLASSES = 10
KSIZE = 5
PAD = KSIZE // 2
POOL = 2
H_OUT, W_OUT = H // POOL, W // POOL
P_SPATIAL = H_OUT * W_OUT       # 64 pooled positions per sample
M = N * P_SPATIAL               # 128 pooled rows total
KKC = KSIZE * KSIZE * C_IN      # 100
KKC_PAD = 128                   # zero-pad contraction dim to a lane multiple
DROPOUT_P = 0.0                 # nn.Dropout(0.0) == identity


# ---------------------------------------------------------------------------
# Single fused kernel: conv(+bias) + relu + maxpool + fc0 + relu + fclast
# ---------------------------------------------------------------------------
def fused_cnn_kernel(patches_ref, wconv_ref, w0_ref, b0_ref,
                     mask_ref, w1_ref, b1_ref, o_ref):
    """patches_ref: (4*M, KKC_PAD) im2col rows ordered (pool_offset, n, ho, wo),
    column KKC holds a constant 1.0 (bias column);
    wconv_ref: (KKC_PAD, CONV_DIM) with row KKC = conv bias;
    w0_ref: (CONV_DIM, M, HIDDEN) fc0 weights permuted to (channel, row, hid);
    b0_ref: (1, HIDDEN); mask_ref: (N, M) per-sample row selector;
    w1_ref: (HIDDEN, NUM_CLASSES); b1_ref: (1, NUM_CLASSES)."""
    # conv (+bias) for all 4 pooling offsets: one 512-row MXU matmul
    y = jnp.dot(patches_ref[...], wconv_ref[...],
                preferred_element_type=jnp.float32)                  # (4M, Cout)
    # 2x2 max-pool = elementwise max over the four 128-row slabs
    pooled = jnp.maximum(jnp.maximum(y[0:M, :], y[M:2 * M, :]),
                         jnp.maximum(y[2 * M:3 * M, :], y[3 * M:4 * M, :]))
    # relu (bias already folded into the matmul; +const / relu commute with max)
    a = jnp.maximum(pooled, 0.0)                                     # (M, Cout)

    # fc0: contract channels with lane-broadcast FMAs (balanced tree to keep
    # the VPU dependency chain short); weight rows were pre-permuted host-side,
    # so no NCHW flatten / transpose / relayout here.
    parts = [a[:, c:c + 1] * w0_ref[c] for c in range(CONV_DIM)]
    while len(parts) > 1:
        parts = [parts[i] + parts[i + 1] for i in range(0, len(parts), 2)]
    z = parts[0]                                                     # (M, HIDDEN)
    # reduce the 64 spatial rows of each sample with a tiny selector matmul
    h = jnp.dot(mask_ref[...], z, preferred_element_type=jnp.float32)  # (N, HIDDEN)
    # TODO(synk): training-mode dropout (p > 0) not implemented; p=0.0 / eval == identity.
    h = jnp.maximum(h + b0_ref[...], 0.0)
    o_ref[...] = (jnp.dot(h, w1_ref[...], preferred_element_type=jnp.float32)
                  + b1_ref[...])


# ---------------------------------------------------------------------------
# Host-side glue
# ---------------------------------------------------------------------------
def _im2col_pooled(x_nchw):
    """(N,C,H,W) -> (4*M, KKC_PAD) patches; rows ordered (ph, pw, n, ho, wo),
    cols ordered (kh, kw, cin), zero-padded to KKC_PAD lanes; column KKC is a
    constant 1.0 so the conv bias can ride the MXU matmul."""
    xp = jnp.pad(jnp.transpose(x_nchw, (0, 2, 3, 1)),
                 ((0, 0), (PAD, PAD), (PAD, PAD), (0, 0)))           # (N,H+4,W+4,C)
    taps = jnp.stack([xp[:, kh:kh + H, kw:kw + W, :]
                      for kh in range(KSIZE) for kw in range(KSIZE)],
                     axis=3)                                          # (N,H,W,25,C)
    t = taps.reshape(N, H_OUT, POOL, W_OUT, POOL, KSIZE * KSIZE, C_IN)
    t = t.transpose(2, 4, 0, 1, 3, 5, 6)          # (ph, pw, n, ho, wo, 25, cin)
    patches = t.reshape(POOL * POOL * M, KKC)
    patches = jnp.pad(patches, ((0, 0), (0, KKC_PAD - KKC)))
    return patches.at[:, KKC].set(1.0)            # bias column


def prepare_params(conv_w, conv_b, fc0_w, fc0_b, fcl_w, fcl_b):
    """One-time repack of module parameters into kernel-ready layout."""
    wconv = jnp.transpose(conv_w, (2, 3, 1, 0)).reshape(KKC, CONV_DIM)
    wconv = jnp.pad(wconv, ((0, KKC_PAD - KKC), (0, 0)))
    wconv = wconv.at[KKC, :].set(conv_b)           # bias row (pairs with ones col)
    # fc0 rows follow torch's NCHW flatten (c*64 + ho*8 + wo); repack to
    # (channel, pooled-row, hidden), tiled over the N samples along rows.
    w0big = jnp.concatenate(
        [fc0_w.reshape(CONV_DIM, P_SPATIAL, HIDDEN)] * N, axis=1)     # (8, M, 32)
    mask = (jnp.arange(M)[None, :] // P_SPATIAL
            == jnp.arange(N)[:, None]).astype(jnp.float32)            # (N, M)
    return dict(wconv=wconv, w0big=w0big, b0=fc0_b.reshape(1, HIDDEN),
                mask=mask, w1=fcl_w, b1=fcl_b.reshape(1, NUM_CLASSES))


@jax.jit
def forward(x, params):
    assert x.shape == (N, C_IN, H, W)
    patches = _im2col_pooled(x)
    return pl.pallas_call(
        fused_cnn_kernel,
        out_shape=jax.ShapeDtypeStruct((N, NUM_CLASSES), jnp.float32),
        grid=(1,),
        in_specs=[
            pl.BlockSpec((POOL * POOL * M, KKC_PAD), lambda i: (0, 0)),
            pl.BlockSpec((KKC_PAD, CONV_DIM), lambda i: (0, 0)),
            pl.BlockSpec((CONV_DIM, M, HIDDEN), lambda i: (0, 0, 0)),
            pl.BlockSpec((1, HIDDEN), lambda i: (0, 0)),
            pl.BlockSpec((N, M), lambda i: (0, 0)),
            pl.BlockSpec((HIDDEN, NUM_CLASSES), lambda i: (0, 0)),
            pl.BlockSpec((1, NUM_CLASSES), lambda i: (0, 0)),
        ],
        out_specs=pl.BlockSpec((N, NUM_CLASSES), lambda i: (0, 0)),
        compiler_params=pltpu.CompilerParams(
            dimension_semantics=("arbitrary",)),
    )(patches, params["wconv"], params["w0big"], params["b0"],
      params["mask"], params["w1"], params["b1"])


# ---------------------------------------------------------------------------
# Deterministic parameter init (xavier uniform weights, torch-default bias)
# ---------------------------------------------------------------------------
def xavier_uniform(key, shape, fan_in, fan_out):
    limit = (6.0 / (fan_in + fan_out)) ** 0.5
    return jax.random.uniform(key, shape, jnp.float32, -limit, limit)


if __name__ == "__main__":
    key = jax.random.PRNGKey(0)
    keys = jax.random.split(key, 8)

    x = jax.random.normal(keys[0], (N, C_IN, H, W), jnp.float32)

    conv_w = xavier_uniform(keys[1], (CONV_DIM, C_IN, KSIZE, KSIZE),
                            C_IN * KSIZE * KSIZE, CONV_DIM * KSIZE * KSIZE)
    cb_lim = 1.0 / (C_IN * KSIZE * KSIZE) ** 0.5
    conv_b = jax.random.uniform(keys[2], (CONV_DIM,), jnp.float32, -cb_lim, cb_lim)

    feat_dim = CONV_DIM * H_OUT * W_OUT          # 8 * 8 * 8 = 512
    fc0_w = xavier_uniform(keys[3], (feat_dim, HIDDEN), feat_dim, HIDDEN)
    b0_lim = 1.0 / feat_dim ** 0.5
    fc0_b = jax.random.uniform(keys[4], (HIDDEN,), jnp.float32, -b0_lim, b0_lim)
    fcl_w = xavier_uniform(keys[5], (HIDDEN, NUM_CLASSES), HIDDEN, NUM_CLASSES)
    bl_lim = 1.0 / HIDDEN ** 0.5
    fcl_b = jax.random.uniform(keys[6], (NUM_CLASSES,), jnp.float32, -bl_lim, bl_lim)

    params = prepare_params(conv_w, conv_b, fc0_w, fc0_b, fcl_w, fcl_b)

    # ---- Pallas forward (single fused kernel) ----
    out = jax.block_until_ready(forward(x, params))

    # ---- pure-JAX f32 reference for sanity ----
    ref = lax.conv_general_dilated(x, conv_w, (1, 1), [(PAD, PAD), (PAD, PAD)],
                                   dimension_numbers=('NCHW', 'OIHW', 'NCHW'))
    ref = jnp.maximum(ref + conv_b[None, :, None, None], 0.0)
    ref = lax.reduce_window(ref, -jnp.inf, lax.max,
                            (1, 1, POOL, POOL), (1, 1, POOL, POOL), 'VALID')
    ref = ref.reshape(N, -1)
    ref = jnp.maximum(ref @ fc0_w + fc0_b, 0.0)
    ref = ref @ fcl_w + fcl_b

    assert out.shape == (N, NUM_CLASSES)
    assert jnp.allclose(out, ref, atol=2e-3, rtol=2e-3), \
        float(jnp.max(jnp.abs(out - ref)))
    print("KERNEL_OK")
</pallas_src>

<mosaic_0001>
module attributes {stable_mosaic.version = 11 : i64} {
  func.func @fused_cnn_kernel(%arg0: i32, %arg1: memref<512x128xf32, #tpu.memory_space<vmem>>, %arg2: memref<128x8xf32, #tpu.memory_space<vmem>>, %arg3: memref<8x128x32xf32, #tpu.memory_space<vmem>>, %arg4: memref<1x32xf32, #tpu.memory_space<vmem>>, %arg5: memref<2x128xf32, #tpu.memory_space<vmem>>, %arg6: memref<32x10xf32, #tpu.memory_space<vmem>>, %arg7: memref<1x10xf32, #tpu.memory_space<vmem>>, %arg8: memref<2x10xf32, #tpu.memory_space<vmem>>) attributes {dimension_semantics = [#tpu.dimension_semantics<arbitrary>], iteration_bounds = array<i64: 1>, scalar_prefetch = 0 : i64, scratch_operands = 0 : i64, tpu.core_type = #tpu.core_type<tc>, window_params = [{pipeline_mode = #tpu.pipeline_mode<synchronous>, transform_indices = @transform_0, window_bounds = array<i64: 512, 128>}, {pipeline_mode = #tpu.pipeline_mode<synchronous>, transform_indices = @transform_1, window_bounds = array<i64: 128, 8>}, {pipeline_mode = #tpu.pipeline_mode<synchronous>, transform_indices = @transform_2, window_bounds = array<i64: 8, 128, 32>}, {pipeline_mode = #tpu.pipeline_mode<synchronous>, transform_indices = @transform_3, window_bounds = array<i64: 1, 32>}, {pipeline_mode = #tpu.pipeline_mode<synchronous>, transform_indices = @transform_4, window_bounds = array<i64: 2, 128>}, {pipeline_mode = #tpu.pipeline_mode<synchronous>, transform_indices = @transform_5, window_bounds = array<i64: 32, 10>}, {pipeline_mode = #tpu.pipeline_mode<synchronous>, transform_indices = @transform_6, window_bounds = array<i64: 1, 10>}, {pipeline_mode = #tpu.pipeline_mode<synchronous>, transform_indices = @transform_7, window_bounds = array<i64: 2, 10>}]} {
    %c0 = arith.constant 0 : index
    %c0_0 = arith.constant 0 : index
    %0 = vector.load %arg1[%c0, %c0_0] : memref<512x128xf32, #tpu.memory_space<vmem>>, vector<512x128xf32>
    %c0_1 = arith.constant 0 : index
    %c0_2 = arith.constant 0 : index
    %1 = vector.load %arg2[%c0_1, %c0_2] : memref<128x8xf32, #tpu.memory_space<vmem>>, vector<128x8xf32>
    %cst = arith.constant dense<0.000000e+00> : vector<512x8xf32>
    %2 = tpu.matmul %0, %1, %cst {dimension_numbers = #tpu.dot_dimension_numbers<[1], [0], [0], [1], [0, 0, 1, 1], [], []>} : vector<512x128xf32>, vector<128x8xf32>, vector<512x8xf32> -> vector<512x8xf32>
    %3 = vector.extract_strided_slice %2 {offsets = [0, 0], sizes = [128, 8], strides = [1, 1]} : vector<512x8xf32> to vector<128x8xf32>
    %4 = vector.extract_strided_slice %2 {offsets = [128, 0], sizes = [128, 8], strides = [1, 1]} : vector<512x8xf32> to vector<128x8xf32>
    %5 = arith.maximumf %3, %4 : vector<128x8xf32>
    %6 = vector.extract_strided_slice %2 {offsets = [256, 0], sizes = [128, 8], strides = [1, 1]} : vector<512x8xf32> to vector<128x8xf32>
    %7 = vector.extract_strided_slice %2 {offsets = [384, 0], sizes = [128, 8], strides = [1, 1]} : vector<512x8xf32> to vector<128x8xf32>
    %8 = arith.maximumf %6, %7 : vector<128x8xf32>
    %9 = arith.maximumf %5, %8 : vector<128x8xf32>
    %cst_3 = arith.constant 0.000000e+00 : f32
    %10 = vector.broadcast %cst_3 : f32 to vector<128x8xf32>
    %11 = arith.maximumf %9, %10 : vector<128x8xf32>
    %12 = vector.extract_strided_slice %11 {offsets = [0, 0], sizes = [128, 1], strides = [1, 1]} : vector<128x8xf32> to vector<128x1xf32>
    %c0_4 = arith.constant 0 : index
    %c0_5 = arith.constant 0 : index
    %c0_6 = arith.constant 0 : index
    %13 = vector.load %arg3[%c0_4, %c0_5, %c0_6] : memref<8x128x32xf32, #tpu.memory_space<vmem>>, vector<1x128x32xf32>
    %14 = vector.shape_cast %13 : vector<1x128x32xf32> to vector<128x32xf32>
    %15 = vector.broadcast %12 : vector<128x1xf32> to vector<128x32xf32>
    %16 = arith.mulf %15, %14 : vector<128x32xf32>
    %17 = vector.extract_strided_slice %11 {offsets = [0, 1], sizes = [128, 1], strides = [1, 1]} : vector<128x8xf32> to vector<128x1xf32>
    %c1 = arith.constant 1 : index
    %c0_7 = arith.constant 0 : index
    %c0_8 = arith.constant 0 : index
    %18 = vector.load %arg3[%c1, %c0_7, %c0_8] : memref<8x128x32xf32, #tpu.memory_space<vmem>>, vector<1x128x32xf32>
    %19 = vector.shape_cast %18 : vector<1x128x32xf32> to vector<128x32xf32>
    %20 = vector.broadcast %17 : vector<128x1xf32> to vector<128x32xf32>
    %21 = arith.mulf %20, %19 : vector<128x32xf32>
    %22 = vector.extract_strided_slice %11 {offsets = [0, 2], sizes = [128, 1], strides = [1, 1]} : vector<128x8xf32> to vector<128x1xf32>
    %c2 = arith.constant 2 : index
    %c0_9 = arith.constant 0 : index
    %c0_10 = arith.constant 0 : index
    %23 = vector.load %arg3[%c2, %c0_9, %c0_10] : memref<8x128x32xf32, #tpu.memory_space<vmem>>, vector<1x128x32xf32>
    %24 = vector.shape_cast %23 : vector<1x128x32xf32> to vector<128x32xf32>
    %25 = vector.broadcast %22 : vector<128x1xf32> to vector<128x32xf32>
    %26 = arith.mulf %25, %24 : vector<128x32xf32>
    %27 = vector.extract_strided_slice %11 {offsets = [0, 3], sizes = [128, 1], strides = [1, 1]} : vector<128x8xf32> to vector<128x1xf32>
    %c3 = arith.constant 3 : index
    %c0_11 = arith.constant 0 : index
    %c0_12 = arith.constant 0 : index
    %28 = vector.load %arg3[%c3, %c0_11, %c0_12] : memref<8x128x32xf32, #tpu.memory_space<vmem>>, vector<1x128x32xf32>
    %29 = vector.shape_cast %28 : vector<1x128x32xf32> to vector<128x32xf32>
    %30 = vector.broadcast %27 : vector<128x1xf32> to vector<128x32xf32>
    %31 = arith.mulf %30, %29 : vector<128x32xf32>
    %32 = vector.extract_strided_slice %11 {offsets = [0, 4], sizes = [128, 1], strides = [1, 1]} : vector<128x8xf32> to vector<128x1xf32>
    %c4 = arith.constant 4 : index
    %c0_13 = arith.constant 0 : index
    %c0_14 = arith.constant 0 : index
    %33 = vector.load %arg3[%c4, %c0_13, %c0_14] : memref<8x128x32xf32, #tpu.memory_space<vmem>>, vector<1x128x32xf32>
    %34 = vector.shape_cast %33 : vector<1x128x32xf32> to vector<128x32xf32>
    %35 = vector.broadcast %32 : vector<128x1xf32> to vector<128x32xf32>
    %36 = arith.mulf %35, %34 : vector<128x32xf32>
    %37 = vector.extract_strided_slice %11 {offsets = [0, 5], sizes = [128, 1], strides = [1, 1]} : vector<128x8xf32> to vector<128x1xf32>
    %c5 = arith.constant 5 : index
    %c0_15 = arith.constant 0 : index
    %c0_16 = arith.constant 0 : index
    %38 = vector.load %arg3[%c5, %c0_15, %c0_16] : memref<8x128x32xf32, #tpu.memory_space<vmem>>, vector<1x128x32xf32>
    %39 = vector.shape_cast %38 : vector<1x128x32xf32> to vector<128x32xf32>
    %40 = vector.broadcast %37 : vector<128x1xf32> to vector<128x32xf32>
    %41 = arith.mulf %40, %39 : vector<128x32xf32>
    %42 = vector.extract_strided_slice %11 {offsets = [0, 6], sizes = [128, 1], strides = [1, 1]} : vector<128x8xf32> to vector<128x1xf32>
    %c6 = arith.constant 6 : index
    %c0_17 = arith.constant 0 : index
    %c0_18 = arith.constant 0 : index
    %43 = vector.load %arg3[%c6, %c0_17, %c0_18] : memref<8x128x32xf32, #tpu.memory_space<vmem>>, vector<1x128x32xf32>
    %44 = vector.shape_cast %43 : vector<1x128x32xf32> to vector<128x32xf32>
    %45 = vector.broadcast %42 : vector<128x1xf32> to vector<128x32xf32>
    %46 = arith.mulf %45, %44 : vector<128x32xf32>
    %47 = vector.extract_strided_slice %11 {offsets = [0, 7], sizes = [128, 1], strides = [1, 1]} : vector<128x8xf32> to vector<128x1xf32>
    %c7 = arith.constant 7 : index
    %c0_19 = arith.constant 0 : index
    %c0_20 = arith.constant 0 : index
    %48 = vector.load %arg3[%c7, %c0_19, %c0_20] : memref<8x128x32xf32, #tpu.memory_space<vmem>>, vector<1x128x32xf32>
    %49 = vector.shape_cast %48 : vector<1x128x32xf32> to vector<128x32xf32>
    %50 = vector.broadcast %47 : vector<128x1xf32> to vector<128x32xf32>
    %51 = arith.mulf %50, %49 : vector<128x32xf32>
    %52 = arith.addf %16, %21 : vector<128x32xf32>
    %53 = arith.addf %26, %31 : vector<128x32xf32>
    %54 = arith.addf %36, %41 : vector<128x32xf32>
    %55 = arith.addf %46, %51 : vector<128x32xf32>
    %56 = arith.addf %52, %53 : vector<128x32xf32>
    %57 = arith.addf %54, %55 : vector<128x32xf32>
    %58 = arith.addf %56, %57 : vector<128x32xf32>
    %c0_21 = arith.constant 0 : index
    %c0_22 = arith.constant 0 : index
    %59 = vector.load %arg5[%c0_21, %c0_22] : memref<2x128xf32, #tpu.memory_space<vmem>>, vector<2x128xf32>
    %cst_23 = arith.constant dense<0.000000e+00> : vector<2x32xf32>
    %60 = tpu.matmul %59, %58, %cst_23 {dimension_numbers = #tpu.dot_dimension_numbers<[1], [0], [0], [1], [0, 0, 1, 1], [], []>} : vector<2x128xf32>, vector<128x32xf32>, vector<2x32xf32> -> vector<2x32xf32>
    %c0_24 = arith.constant 0 : index
    %c0_25 = arith.constant 0 : index
    %61 = vector.load %arg4[%c0_24, %c0_25] : memref<1x32xf32, #tpu.memory_space<vmem>>, vector<1x32xf32>
    %62 = vector.broadcast %61 : vector<1x32xf32> to vector<2x32xf32>
    %63 = arith.addf %60, %62 : vector<2x32xf32>
    %cst_26 = arith.constant 0.000000e+00 : f32
    %64 = vector.broadcast %cst_26 : f32 to vector<2x32xf32>
    %65 = arith.maximumf %63, %64 : vector<2x32xf32>
    %c0_27 = arith.constant 0 : index
    %c0_28 = arith.constant 0 : index
    %66 = vector.load %arg6[%c0_27, %c0_28] : memref<32x10xf32, #tpu.memory_space<vmem>>, vector<32x10xf32>
    %cst_29 = arith.constant dense<0.000000e+00> : vector<2x10xf32>
    %67 = tpu.matmul %65, %66, %cst_29 {dimension_numbers = #tpu.dot_dimension_numbers<[1], [0], [0], [1], [0, 0, 1, 1], [], []>} : vector<2x32xf32>, vector<32x10xf32>, vector<2x10xf32> -> vector<2x10xf32>
    %c0_30 = arith.constant 0 : index
    %c0_31 = arith.constant 0 : index
    %68 = vector.load %arg7[%c0_30, %c0_31] : memref<1x10xf32, #tpu.memory_space<vmem>>, vector<1x10xf32>
    %69 = vector.broadcast %68 : vector<1x10xf32> to vector<2x10xf32>
    %70 = arith.addf %67, %69 : vector<2x10xf32>
    %c0_32 = arith.constant 0 : index
    %c0_33 = arith.constant 0 : index
    %71 = vector.load %arg8[%c0_32, %c0_33] : memref<2x10xf32, #tpu.memory_space<vmem>>, vector<2x10xf32>
    tpu.vector_store %arg8[%c0_32, %c0_33], %70 {strides = array<i32>} : memref<2x10xf32, #tpu.memory_space<vmem>>, vector<2x10xf32>,
    return
  }
  func.func @transform_0(%arg0: i32) -> (i32, i32) {
    %c0_i32 = arith.constant 0 : i32
    %c0_i32_0 = arith.constant 0 : i32
    %c0_i32_1 = arith.constant 0 : i32
    return %c0_i32, %c0_i32_0 : i32, i32
  }
  func.func @transform_1(%arg0: i32) -> (i32, i32) {
    %c0_i32 = arith.constant 0 : i32
    %c0_i32_0 = arith.constant 0 : i32
    %c0_i32_1 = arith.constant 0 : i32
    return %c0_i32, %c0_i32_0 : i32, i32
  }
  func.func @transform_2(%arg0: i32) -> (i32, i32, i32) {
    %c0_i32 = arith.constant 0 : i32
    %c0_i32_0 = arith.constant 0 : i32
    %c0_i32_1 = arith.constant 0 : i32
    %c0_i32_2 = arith.constant 0 : i32
    return %c0_i32, %c0_i32_0, %c0_i32_1 : i32, i32, i32
  }
  func.func @transform_3(%arg0: i32) -> (i32, i32) {
    %c0_i32 = arith.constant 0 : i32
    %c0_i32_0 = arith.constant 0 : i32
    %c0_i32_1 = arith.constant 0 : i32
    return %c0_i32, %c0_i32_0 : i32, i32
  }
  func.func @transform_4(%arg0: i32) -> (i32, i32) {
    %c0_i32 = arith.constant 0 : i32
    %c0_i32_0 = arith.constant 0 : i32
    %c0_i32_1 = arith.constant 0 : i32
    return %c0_i32, %c0_i32_0 : i32, i32
  }
  func.func @transform_5(%arg0: i32) -> (i32, i32) {
    %c0_i32 = arith.constant 0 : i32
    %c0_i32_0 = arith.constant 0 : i32
    %c0_i32_1 = arith.constant 0 : i32
    return %c0_i32, %c0_i32_0 : i32, i32
  }
  func.func @transform_6(%arg0: i32) -> (i32, i32) {
    %c0_i32 = arith.constant 0 : i32
    %c0_i32_0 = arith.constant 0 : i32
    %c0_i32_1 = arith.constant 0 : i32
    return %c0_i32, %c0_i32_0 : i32, i32
  }
  func.func @transform_7(%arg0: i32) -> (i32, i32) {
    %c0_i32 = arith.constant 0 : i32
    %c0_i32_0 = arith.constant 0 : i32
    %c0_i32_1 = arith.constant 0 : i32
    return %c0_i32, %c0_i32_0 : i32, i32
  }
}

</mosaic_0001>

<llo_original>
// kernel: forward.1
$region0: #{forward.1}
  #allocation0 [shape = 'u32[]', space=smem, size = 0x4, offset = 0x4, fixed_abs, tag = 'smem constant byte address 0x4 - core index']
  #allocation1 [shape = 'u32[72,128]{1,0:T(1,128)}', space=vmem, size = 0x9000, scoped, tag = 'internal scratch']
  %s0 = inlined_call_operand.vmem [shape: f32[512,128], index: 0, kind: input, shape index: {}]
  %s1 = inlined_call_operand.vmem [shape: f32[128,8], index: 1, kind: input, shape index: {}]
  %s2 = inlined_call_operand.vmem [shape: f32[8,128,32], index: 2, kind: input, shape index: {}]
  %s3 = inlined_call_operand.vmem [shape: f32[1,32], index: 3, kind: input, shape index: {}]
  %s4 = inlined_call_operand.vmem [shape: f32[2,128], index: 4, kind: input, shape index: {}]
  %s5 = inlined_call_operand.vmem [shape: f32[32,10], index: 5, kind: input, shape index: {}]
  %s6 = inlined_call_operand.vmem [shape: f32[1,10], index: 6, kind: input, shape index: {}]
  %s7 = inlined_call_operand.hbm [shape: f32[2,10], index: 7, kind: output, shape index: {}]
  %s8 = sld [smem:[#allocation0]]
  $region38: #{forward.1} parent=0
    _
  %s10 = ssub.s32 1, %s8
  %s11 = scalar_select 0, %s10, %s8
  $region1: #{forward.1} parent=0
    #allocation2 [shape = 'u8[1024]{0}', space=vmem, size = 0x400, scoped, tag = 'output window, operand 0, single buffered']
    #allocation3 [shape = 's32[1]{0}', space=sflag, size = 0x4, scoped, tag = 'scoped memory for forward.1']
    %12 = vsyncpa [#allocation3], 0
    // Predicated region
    $region2: #{forward.1} parent=1 // pred_check
      _
    $region3: #{forward.1} parent=1 // pred_check_branch
      %14 = sbr.rel (0) target = $region5
    $region4: #{forward.1} parent=1 // pred_region
      _
    $region5: #{forward.1} parent=1 // pred_fallthru
      _
    // Predicated region
    $region6: #{forward.1} parent=1 // pred_check
      _
    $region7: #{forward.1} parent=1 // pred_check_branch
      %16 = sbr.rel (0) target = $region9
    $region8: #{forward.1} parent=1 // pred_region
      _
    $region9: #{forward.1} parent=1 // pred_fallthru
      _
    // Predicated region
    $region10: #{forward.1} parent=1 // pred_check
      _
    $region11: #{forward.1} parent=1 // pred_check_branch
      %18 = sbr.rel (0) target = $region13
    $region12: #{forward.1} parent=1 // pred_region
      _
    $region13: #{forward.1} parent=1 // pred_fallthru
      _
    // Predicated region
    $region14: #{forward.1} parent=1 // pred_check
      _
    $region15: #{forward.1} parent=1 // pred_check_branch
      %20 = sbr.rel (0) target = $region17
    $region16: #{forward.1} parent=1 // pred_region
      _
    $region17: #{forward.1} parent=1 // pred_fallthru
      _
    // Predicated region
    $region18: #{forward.1} parent=1 // pred_check
      _
    $region19: #{forward.1} parent=1 // pred_check_branch
      %22 = sbr.rel (0) target = $region21
    $region20: #{forward.1} parent=1 // pred_region
      _
    $region21: #{forward.1} parent=1 // pred_fallthru
      _
    // Predicated region
    $region22: #{forward.1} parent=1 // pred_check
      _
    $region23: #{forward.1} parent=1 // pred_check_branch
      %24 = sbr.rel (0) target = $region25
    $region24: #{forward.1} parent=1 // pred_region
      _
    $region25: #{forward.1} parent=1 // pred_fallthru
      _
    // Predicated region
    $region26: #{forward.1} parent=1 // pred_check
      _
    $region27: #{forward.1} parent=1 // pred_check_branch
      %26 = sbr.rel (0) target = $region29
    $region28: #{forward.1} parent=1 // pred_region
      _
    $region29: #{forward.1} parent=1 // pred_fallthru
      _
    %v27 = vld [vmem:[%s0] sm:$0xff]
    %v28 = vld [vmem:[%s0 + $0x8] sm:$0xff]
    %v29 = vld [vmem:[%s0 + $0x10] sm:$0xff]
    %v30 = vld [vmem:[%s0 + $0x18] sm:$0xff]
    %v31 = vld [vmem:[%s0 + $0x20] sm:$0xff]
    %v32 = vld [vmem:[%s0 + $0x28] sm:$0xff]
    %v33 = vld [vmem:[%s0 + $0x30] sm:$0xff]
    %v34 = vld [vmem:[%s0 + $0x38] sm:$0xff]
    %v35 = vld [vmem:[%s0 + $0x40] sm:$0xff]
    %v36 = vld [vmem:[%s0 + $0x48] sm:$0xff]
    %v37 = vld [vmem:[%s0 + $0x50] sm:$0xff]
    %v38 = vld [vmem:[%s0 + $0x58] sm:$0xff]
    %v39 = vld [vmem:[%s0 + $0x60] sm:$0xff]
    %v40 = vld [vmem:[%s0 + $0x68] sm:$0xff]
    %v41 = vld [vmem:[%s0 + $0x70] sm:$0xff]
    %v42 = vld [vmem:[%s0 + $0x78] sm:$0xff]
    %v43 = vld [vmem:[%s0 + $0x80] sm:$0xff]
    %v44 = vld [vmem:[%s0 + $0x88] sm:$0xff]
    %v45 = vld [vmem:[%s0 + $0x90] sm:$0xff]
    %v46 = vld [vmem:[%s0 + $0x98] sm:$0xff]
    %v47 = vld [vmem:[%s0 + $0xa0] sm:$0xff]
    %v48 = vld [vmem:[%s0 + $0xa8] sm:$0xff]
    %v49 = vld [vmem:[%s0 + $0xb0] sm:$0xff]
    %v50 = vld [vmem:[%s0 + $0xb8] sm:$0xff]
    %v51 = vld [vmem:[%s0 + $0xc0] sm:$0xff]
    %v52 = vld [vmem:[%s0 + $0xc8] sm:$0xff]
    %v53 = vld [vmem:[%s0 + $0xd0] sm:$0xff]
    %v54 = vld [vmem:[%s0 + $0xd8] sm:$0xff]
    %v55 = vld [vmem:[%s0 + $0xe0] sm:$0xff]
    %v56 = vld [vmem:[%s0 + $0xe8] sm:$0xff]
    %v57 = vld [vmem:[%s0 + $0xf0] sm:$0xff]
    %v58 = vld [vmem:[%s0 + $0xf8] sm:$0xff]
    %v59 = vld [vmem:[%s0 + $0x100] sm:$0xff]
    %v60 = vld [vmem:[%s0 + $0x108] sm:$0xff]
    %v61 = vld [vmem:[%s0 + $0x110] sm:$0xff]
    %v62 = vld [vmem:[%s0 + $0x118] sm:$0xff]
    %v63 = vld [vmem:[%s0 + $0x120] sm:$0xff]
    %v64 = vld [vmem:[%s0 + $0x128] sm:$0xff]
    %v65 = vld [vmem:[%s0 + $0x130] sm:$0xff]
    %v66 = vld [vmem:[%s0 + $0x138] sm:$0xff]
    %v67 = vld [vmem:[%s0 + $0x140] sm:$0xff]
    %v68 = vld [vmem:[%s0 + $0x148] sm:$0xff]
    %v69 = vld [vmem:[%s0 + $0x150] sm:$0xff]
    %v70 = vld [vmem:[%s0 + $0x158] sm:$0xff]
    %v71 = vld [vmem:[%s0 + $0x160] sm:$0xff]
    %v72 = vld [vmem:[%s0 + $0x168] sm:$0xff]
    %v73 = vld [vmem:[%s0 + $0x170] sm:$0xff]
    %v74 = vld [vmem:[%s0 + $0x178] sm:$0xff]
    %v75 = vld [vmem:[%s0 + $0x180] sm:$0xff]
    %v76 = vld [vmem:[%s0 + $0x188] sm:$0xff]
    %v77 = vld [vmem:[%s0 + $0x190] sm:$0xff]
    %v78 = vld [vmem:[%s0 + $0x198] sm:$0xff]
    %v79 = vld [vmem:[%s0 + $0x1a0] sm:$0xff]
    %v80 = vld [vmem:[%s0 + $0x1a8] sm:$0xff]
    %v81 = vld [vmem:[%s0 + $0x1b0] sm:$0xff]
    %v82 = vld [vmem:[%s0 + $0x1b8] sm:$0xff]
    %v83 = vld [vmem:[%s0 + $0x1c0] sm:$0xff]
    %v84 = vld [vmem:[%s0 + $0x1c8] sm:$0xff]
    %v85 = vld [vmem:[%s0 + $0x1d0] sm:$0xff]
    %v86 = vld [vmem:[%s0 + $0x1d8] sm:$0xff]
    %v87 = vld [vmem:[%s0 + $0x1e0] sm:$0xff]
    %v88 = vld [vmem:[%s0 + $0x1e8] sm:$0xff]
    %v89 = vld [vmem:[%s0 + $0x1f0] sm:$0xff]
    %v90 = vld [vmem:[%s0 + $0x1f8] sm:$0xff]
    %v91 = vld [vmem:[%s1] sm:$0xff]
    %v92 = vld [vmem:[%s1 + $0x8] sm:$0xff]
    %v93 = vld [vmem:[%s1 + $0x10] sm:$0xff]
    %v94 = vld [vmem:[%s1 + $0x18] sm:$0xff]
    %v95 = vld [vmem:[%s1 + $0x20] sm:$0xff]
    %v96 = vld [vmem:[%s1 + $0x28] sm:$0xff]
    %v97 = vld [vmem:[%s1 + $0x30] sm:$0xff]
    %v98 = vld [vmem:[%s1 + $0x38] sm:$0xff]
    %v99 = vld [vmem:[%s1 + $0x40] sm:$0xff]
    %v100 = vld [vmem:[%s1 + $0x48] sm:$0xff]
    %v101 = vld [vmem:[%s1 + $0x50] sm:$0xff]
    %v102 = vld [vmem:[%s1 + $0x58] sm:$0xff]
    %v103 = vld [vmem:[%s1 + $0x60] sm:$0xff]
    %v104 = vld [vmem:[%s1 + $0x68] sm:$0xff]
    %v105 = vld [vmem:[%s1 + $0x70] sm:$0xff]
    %v106 = vld [vmem:[%s1 + $0x78] sm:$0xff]
    %107 = vmatpush.msra.mxu0 %v106
    %108 = vmatpush.msra.mxu0 %v105
    %109 = vmatpush.msra.mxu0 %v104
    %110 = vmatpush.msra.mxu0 %v103
    %111 = vmatpush.msra.mxu0 %v102
    %112 = vmatpush.msra.mxu0 %v101
    %113 = vmatpush.msra.mxu0 %v100
    %114 = vmatpush.msra.mxu0 %v99
    %115 = vmatpush.msra.mxu0 %v98
    %116 = vmatpush.msra.mxu0 %v97
    %117 = vmatpush.msra.mxu0 %v96
    %118 = vmatpush.msra.mxu0 %v95
    %119 = vmatpush.msra.mxu0 %v94
    %120 = vmatpush.msra.mxu0 %v93
    %121 = vmatpush.msra.mxu0 %v92
    %122 = vmatpush.msra.mxu0 %v91
    %123 = vmatmul.f32.gmra.mxu0 %v27
    %v124 = vpop.f32.mrf.mxu0
    %v125 = vadd.f32 0.0, %v124
    %126 = vmatmul.f32.gmra.mxu0 %v28
    %v127 = vpop.f32.mrf.mxu0
    %v128 = vadd.f32 0.0, %v127
    %129 = vmatmul.f32.gmra.mxu0 %v29
    %v130 = vpop.f32.mrf.mxu0
    %v131 = vadd.f32 0.0, %v130
    %132 = vmatmul.f32.gmra.mxu0 %v30
    %v133 = vpop.f32.mrf.mxu0
    %v134 = vadd.f32 0.0, %v133
    %135 = vmatmul.f32.gmra.mxu0 %v31
    %v136 = vpop.f32.mrf.mxu0
    %v137 = vadd.f32 0.0, %v136
    %138 = vmatmul.f32.gmra.mxu0 %v32
    %v139 = vpop.f32.mrf.mxu0
    %v140 = vadd.f32 0.0, %v139
    %141 = vmatmul.f32.gmra.mxu0 %v33
    %v142 = vpop.f32.mrf.mxu0
    %v143 = vadd.f32 0.0, %v142
    %144 = vmatmul.f32.gmra.mxu0 %v34
    %v145 = vpop.f32.mrf.mxu0
    %v146 = vadd.f32 0.0, %v145
    %147 = vmatmul.f32.gmra.mxu0 %v35
    %v148 = vpop.f32.mrf.mxu0
    %v149 = vadd.f32 0.0, %v148
    %150 = vmatmul.f32.gmra.mxu0 %v36
    %v151 = vpop.f32.mrf.mxu0
    %v152 = vadd.f32 0.0, %v151
    %153 = vmatmul.f32.gmra.mxu0 %v37
    %v154 = vpop.f32.mrf.mxu0
    %v155 = vadd.f32 0.0, %v154
    %156 = vmatmul.f32.gmra.mxu0 %v38
    %v157 = vpop.f32.mrf.mxu0
    %v158 = vadd.f32 0.0, %v157
    %159 = vmatmul.f32.gmra.mxu0 %v39
    %v160 = vpop.f32.mrf.mxu0
    %v161 = vadd.f32 0.0, %v160
    %162 = vmatmul.f32.gmra.mxu0 %v40
    %v163 = vpop.f32.mrf.mxu0
    %v164 = vadd.f32 0.0, %v163
    %165 = vmatmul.f32.gmra.mxu0 %v41
    %v166 = vpop.f32.mrf.mxu0
    %v167 = vadd.f32 0.0, %v166
    %168 = vmatmul.f32.gmra.mxu0 %v42
    %v169 = vpop.f32.mrf.mxu0
    %v170 = vadd.f32 0.0, %v169
    %171 = vmatmul.f32.gmra.mxu0 %v43
    %v172 = vpop.f32.mrf.mxu0
    %v173 = vadd.f32 0.0, %v172
    %174 = vmatmul.f32.gmra.mxu0 %v44
    %v175 = vpop.f32.mrf.mxu0
    %v176 = vadd.f32 0.0, %v175
    %177 = vmatmul.f32.gmra.mxu0 %v45
    %v178 = vpop.f32.mrf.mxu0
    %v179 = vadd.f32 0.0, %v178
    %180 = vmatmul.f32.gmra.mxu0 %v46
    %v181 = vpop.f32.mrf.mxu0
    %v182 = vadd.f32 0.0, %v181
    %183 = vmatmul.f32.gmra.mxu0 %v47
    %v184 = vpop.f32.mrf.mxu0
    %v185 = vadd.f32 0.0, %v184
    %186 = vmatmul.f32.gmra.mxu0 %v48
    %v187 = vpop.f32.mrf.mxu0
    %v188 = vadd.f32 0.0, %v187
    %189 = vmatmul.f32.gmra.mxu0 %v49
    %v190 = vpop.f32.mrf.mxu0
    %v191 = vadd.f32 0.0, %v190
    %192 = vmatmul.f32.gmra.mxu0 %v50
    %v193 = vpop.f32.mrf.mxu0
    %v194 = vadd.f32 0.0, %v193
    %195 = vmatmul.f32.gmra.mxu0 %v51
    %v196 = vpop.f32.mrf.mxu0
    %v197 = vadd.f32 0.0, %v196
    %198 = vmatmul.f32.gmra.mxu0 %v52
    %v199 = vpop.f32.mrf.mxu0
    %v200 = vadd.f32 0.0, %v199
    %201 = vmatmul.f32.gmra.mxu0 %v53
    %v202 = vpop.f32.mrf.mxu0
    %v203 = vadd.f32 0.0, %v202
    %204 = vmatmul.f32.gmra.mxu0 %v54
    %v205 = vpop.f32.mrf.mxu0
    %v206 = vadd.f32 0.0, %v205
    %207 = vmatmul.f32.gmra.mxu0 %v55
    %v208 = vpop.f32.mrf.mxu0
    %v209 = vadd.f32 0.0, %v208
    %210 = vmatmul.f32.gmra.mxu0 %v56
    %v211 = vpop.f32.mrf.mxu0
    %v212 = vadd.f32 0.0, %v211
    %213 = vmatmul.f32.gmra.mxu0 %v57
    %v214 = vpop.f32.mrf.mxu0
    %v215 = vadd.f32 0.0, %v214
    %216 = vmatmul.f32.gmra.mxu0 %v58
    %v217 = vpop.f32.mrf.mxu0
    %v218 = vadd.f32 0.0, %v217
    %219 = vmatmul.f32.gmra.mxu0 %v59
    %v220 = vpop.f32.mrf.mxu0
    %v221 = vadd.f32 0.0, %v220
    %222 = vmatmul.f32.gmra.mxu0 %v60
    %v223 = vpop.f32.mrf.mxu0
    %v224 = vadd.f32 0.0, %v223
    %225 = vmatmul.f32.gmra.mxu0 %v61
    %v226 = vpop.f32.mrf.mxu0
    %v227 = vadd.f32 0.0, %v226
    %228 = vmatmul.f32.gmra.mxu0 %v62
    %v229 = vpop.f32.mrf.mxu0
    %v230 = vadd.f32 0.0, %v229
    %231 = vmatmul.f32.gmra.mxu0 %v63
    %v232 = vpop.f32.mrf.mxu0
    %v233 = vadd.f32 0.0, %v232
    %234 = vmatmul.f32.gmra.mxu0 %v64
    %v235 = vpop.f32.mrf.mxu0
    %v236 = vadd.f32 0.0, %v235
    %237 = vmatmul.f32.gmra.mxu0 %v65
    %v238 = vpop.f32.mrf.mxu0
    %v239 = vadd.f32 0.0, %v238
    %240 = vmatmul.f32.gmra.mxu0 %v66
    %v241 = vpop.f32.mrf.mxu0
    %v242 = vadd.f32 0.0, %v241
    %243 = vmatmul.f32.gmra.mxu0 %v67
    %v244 = vpop.f32.mrf.mxu0
    %v245 = vadd.f32 0.0, %v244
    %246 = vmatmul.f32.gmra.mxu0 %v68
    %v247 = vpop.f32.mrf.mxu0
    %v248 = vadd.f32 0.0, %v247
    %249 = vmatmul.f32.gmra.mxu0 %v69
    %v250 = vpop.f32.mrf.mxu0
    %v251 = vadd.f32 0.0, %v250
    %252 = vmatmul.f32.gmra.mxu0 %v70
    %v253 = vpop.f32.mrf.mxu0
    %v254 = vadd.f32 0.0, %v253
    %255 = vmatmul.f32.gmra.mxu0 %v71
    %v256 = vpop.f32.mrf.mxu0
    %v257 = vadd.f32 0.0, %v256
    %258 = vmatmul.f32.gmra.mxu0 %v72
    %v259 = vpop.f32.mrf.mxu0
    %v260 = vadd.f32 0.0, %v259
    %261 = vmatmul.f32.gmra.mxu0 %v73
    %v262 = vpop.f32.mrf.mxu0
    %v263 = vadd.f32 0.0, %v262
    %264 = vmatmul.f32.gmra.mxu0 %v74
    %v265 = vpop.f32.mrf.mxu0
    %v266 = vadd.f32 0.0, %v265
    %267 = vmatmul.f32.gmra.mxu0 %v75
    %v268 = vpop.f32.mrf.mxu0
    %v269 = vadd.f32 0.0, %v268
    %270 = vmatmul.f32.gmra.mxu0 %v76
    %v271 = vpop.f32.mrf.mxu0
    %v272 = vadd.f32 0.0, %v271
    %273 = vmatmul.f32.gmra.mxu0 %v77
    %v274 = vpop.f32.mrf.mxu0
    %v275 = vadd.f32 0.0, %v274
    %276 = vmatmul.f32.gmra.mxu0 %v78
    %v277 = vpop.f32.mrf.mxu0
    %v278 = vadd.f32 0.0, %v277
    %279 = vmatmul.f32.gmra.mxu0 %v79
    %v280 = vpop.f32.mrf.mxu0
    %v281 = vadd.f32 0.0, %v280
    %282 = vmatmul.f32.gmra.mxu0 %v80
    %v283 = vpop.f32.mrf.mxu0
    %v284 = vadd.f32 0.0, %v283
    %285 = vmatmul.f32.gmra.mxu0 %v81
    %v286 = vpop.f32.mrf.mxu0
    %v287 = vadd.f32 0.0, %v286
    %288 = vmatmul.f32.gmra.mxu0 %v82
    %v289 = vpop.f32.mrf.mxu0
    %v290 = vadd.f32 0.0, %v289
    %291 = vmatmul.f32.gmra.mxu0 %v83
    %v292 = vpop.f32.mrf.mxu0
    %v293 = vadd.f32 0.0, %v292
    %294 = vmatmul.f32.gmra.mxu0 %v84
    %v295 = vpop.f32.mrf.mxu0
    %v296 = vadd.f32 0.0, %v295
    %297 = vmatmul.f32.gmra.mxu0 %v85
    %v298 = vpop.f32.mrf.mxu0
    %v299 = vadd.f32 0.0, %v298
    %300 = vmatmul.f32.gmra.mxu0 %v86
    %v301 = vpop.f32.mrf.mxu0
    %v302 = vadd.f32 0.0, %v301
    %303 = vmatmul.f32.gmra.mxu0 %v87
    %v304 = vpop.f32.mrf.mxu0
    %v305 = vadd.f32 0.0, %v304
    %306 = vmatmul.f32.gmra.mxu0 %v88
    %v307 = vpop.f32.mrf.mxu0
    %v308 = vadd.f32 0.0, %v307
    %309 = vmatmul.f32.gmra.mxu0 %v89
    %v310 = vpop.f32.mrf.mxu0
    %v311 = vadd.f32 0.0, %v310
    %312 = vmatmul.f32.gmra.mxu0 %v90
    %v313 = vpop.f32.mrf.mxu0
    %v314 = vadd.f32 0.0, %v313
    %315 = vdwg.mxu0
    %v316 = vmax.f32 %v125, %v173
    %v317 = vmax.f32 %v128, %v176
    %v318 = vmax.f32 %v131, %v179
    %v319 = vmax.f32 %v134, %v182
    %v320 = vmax.f32 %v137, %v185
    %v321 = vmax.f32 %v140, %v188
    %v322 = vmax.f32 %v143, %v191
    %v323 = vmax.f32 %v146, %v194
    %v324 = vmax.f32 %v149, %v197
    %v325 = vmax.f32 %v152, %v200
    %v326 = vmax.f32 %v155, %v203
    %v327 = vmax.f32 %v158, %v206
    %v328 = vmax.f32 %v161, %v209
    %v329 = vmax.f32 %v164, %v212
    %v330 = vmax.f32 %v167, %v215
    %v331 = vmax.f32 %v170, %v218
    %v332 = vmax.f32 %v221, %v269
    %v333 = vmax.f32 %v224, %v272
    %v334 = vmax.f32 %v227, %v275
    %v335 = vmax.f32 %v230, %v278
    %v336 = vmax.f32 %v233, %v281
    %v337 = vmax.f32 %v236, %v284
    %v338 = vmax.f32 %v239, %v287
    %v339 = vmax.f32 %v242, %v290
    %v340 = vmax.f32 %v245, %v293
    %v341 = vmax.f32 %v248, %v296
    %v342 = vmax.f32 %v251, %v299
    %v343 = vmax.f32 %v254, %v302
    %v344 = vmax.f32 %v257, %v305
    %v345 = vmax.f32 %v260, %v308
    %v346 = vmax.f32 %v263, %v311
    %v347 = vmax.f32 %v266, %v314
    %v348 = vmax.f32 %v316, %v332
    %v349 = vmax.f32 %v317, %v333
    %v350 = vmax.f32 %v318, %v334
    %v351 = vmax.f32 %v319, %v335
    %v352 = vmax.f32 %v320, %v336
    %v353 = vmax.f32 %v321, %v337
    %v354 = vmax.f32 %v322, %v338
    %v355 = vmax.f32 %v323, %v339
    %v356 = vmax.f32 %v324, %v340
    %v357 = vmax.f32 %v325, %v341
    %v358 = vmax.f32 %v326, %v342
    %v359 = vmax.f32 %v327, %v343
    %v360 = vmax.f32 %v328, %v344
    %v361 = vmax.f32 %v329, %v345
    %v362 = vmax.f32 %v330, %v346
    %v363 = vmax.f32 %v331, %v347
    %v364 = vmax.f32 %v348, 0.0
    %v365 = vmax.f32 %v349, 0.0
    %v366 = vmax.f32 %v350, 0.0
    %v367 = vmax.f32 %v351, 0.0
    %v368 = vmax.f32 %v352, 0.0
    %v369 = vmax.f32 %v353, 0.0
    %v370 = vmax.f32 %v354, 0.0
    %v371 = vmax.f32 %v355, 0.0
    %v372 = vmax.f32 %v356, 0.0
    %v373 = vmax.f32 %v357, 0.0
    %v374 = vmax.f32 %v358, 0.0
    %v375 = vmax.f32 %v359, 0.0
    %v376 = vmax.f32 %v360, 0.0
    %v377 = vmax.f32 %v361, 0.0
    %v378 = vmax.f32 %v362, 0.0
    %v379 = vmax.f32 %v363, 0.0
    %v380 = vld [vmem:[%s2] sm:$0xff]
    %v381 = vld [vmem:[%s2 + $0x8] sm:$0xff]
    %v382 = vld [vmem:[%s2 + $0x10] sm:$0xff]
    %v383 = vld [vmem:[%s2 + $0x18] sm:$0xff]
    %v384 = vld [vmem:[%s2 + $0x20] sm:$0xff]
    %v385 = vld [vmem:[%s2 + $0x28] sm:$0xff]
    %v386 = vld [vmem:[%s2 + $0x30] sm:$0xff]
    %v387 = vld [vmem:[%s2 + $0x38] sm:$0xff]
    %v388 = vld [vmem:[%s2 + $0x40] sm:$0xff]
    %v389 = vld [vmem:[%s2 + $0x48] sm:$0xff]
    %v390 = vld [vmem:[%s2 + $0x50] sm:$0xff]
    %v391 = vld [vmem:[%s2 + $0x58] sm:$0xff]
    %v392 = vld [vmem:[%s2 + $0x60] sm:$0xff]
    %v393 = vld [vmem:[%s2 + $0x68] sm:$0xff]
    %v394 = vld [vmem:[%s2 + $0x70] sm:$0xff]
    %v395 = vld [vmem:[%s2 + $0x78] sm:$0xff]
    %397 = vset.pattern.permute.xlu0 0
    %398 = vperm.xlu0 %397, %v364
    %v399 = vpop.permute.xlu0 %398
    %402 = vset.pattern.permute.xlu0 0
    %403 = vperm.xlu0 %402, %v365
    %v404 = vpop.permute.xlu0 %403
    %407 = vset.pattern.permute.xlu0 0
    %408 = vperm.xlu0 %407, %v366
    %v409 = vpop.permute.xlu0 %408
    %412 = vset.pattern.permute.xlu0 0
    %413 = vperm.xlu0 %412, %v367
    %v414 = vpop.permute.xlu0 %413
    %417 = vset.pattern.permute.xlu0 0
    %418 = vperm.xlu0 %417, %v368
    %v419 = vpop.permute.xlu0 %418
    %422 = vset.pattern.permute.xlu0 0
    %423 = vperm.xlu0 %422, %v369
    %v424 = vpop.permute.xlu0 %423
    %427 = vset.pattern.permute.xlu0 0
    %428 = vperm.xlu0 %427, %v370
    %v429 = vpop.permute.xlu0 %428
    %432 = vset.pattern.permute.xlu0 0
    %433 = vperm.xlu0 %432, %v371
    %v434 = vpop.permute.xlu0 %433
    %437 = vset.pattern.permute.xlu0 0
    %438 = vperm.xlu0 %437, %v372
    %v439 = vpop.permute.xlu0 %438
    %442 = vset.pattern.permute.xlu0 0
    %443 = vperm.xlu0 %442, %v373
    %v444 = vpop.permute.xlu0 %443
    %447 = vset.pattern.permute.xlu0 0
    %448 = vperm.xlu0 %447, %v374
    %v449 = vpop.permute.xlu0 %448
    %452 = vset.pattern.permute.xlu0 0
    %453 = vperm.xlu0 %452, %v375
    %v454 = vpop.permute.xlu0 %453
    %457 = vset.pattern.permute.xlu0 0
    %458 = vperm.xlu0 %457, %v376
    %v459 = vpop.permute.xlu0 %458
    %462 = vset.pattern.permute.xlu0 0
    %463 = vperm.xlu0 %462, %v377
    %v464 = vpop.permute.xlu0 %463
    %467 = vset.pattern.permute.xlu0 0
    %468 = vperm.xlu0 %467, %v378
    %v469 = vpop.permute.xlu0 %468
    %472 = vset.pattern.permute.xlu0 0
    %473 = vperm.xlu0 %472, %v379
    %v474 = vpop.permute.xlu0 %473
    %v476 = vmul.f32 %v399, %v380
    %v477 = vmul.f32 %v404, %v381
    %v478 = vmul.f32 %v409, %v382
    %v479 = vmul.f32 %v414, %v383
    %v480 = vmul.f32 %v419, %v384
    %v481 = vmul.f32 %v424, %v385
    %v482 = vmul.f32 %v429, %v386
    %v483 = vmul.f32 %v434, %v387
    %v484 = vmul.f32 %v439, %v388
    %v485 = vmul.f32 %v444, %v389
    %v486 = vmul.f32 %v449, %v390
    %v487 = vmul.f32 %v454, %v391
    %v488 = vmul.f32 %v459, %v392
    %v489 = vmul.f32 %v464, %v393
    %v490 = vmul.f32 %v469, %v394
    %v491 = vmul.f32 %v474, %v395
    %s492 = scalar_lea.vmem %s2, 128
    %v493 = vld [vmem:[%s492] sm:$0xff]
    %v494 = vld [vmem:[%s492 + $0x8] sm:$0xff]
    %v495 = vld [vmem:[%s492 + $0x10] sm:$0xff]
    %v496 = vld [vmem:[%s492 + $0x18] sm:$0xff]
    %v497 = vld [vmem:[%s492 + $0x20] sm:$0xff]
    %v498 = vld [vmem:[%s492 + $0x28] sm:$0xff]
    %v499 = vld [vmem:[%s492 + $0x30] sm:$0xff]
    %v500 = vld [vmem:[%s492 + $0x38] sm:$0xff]
    %v501 = vld [vmem:[%s492 + $0x40] sm:$0xff]
    %v502 = vld [vmem:[%s492 + $0x48] sm:$0xff]
    %v503 = vld [vmem:[%s492 + $0x50] sm:$0xff]
    %v504 = vld [vmem:[%s492 + $0x58] sm:$0xff]
    %v505 = vld [vmem:[%s492 + $0x60] sm:$0xff]
    %v506 = vld [vmem:[%s492 + $0x68] sm:$0xff]
    %v507 = vld [vmem:[%s492 + $0x70] sm:$0xff]
    %v508 = vld [vmem:[%s492 + $0x78] sm:$0xff]
    %509 = vset.pattern.permute.xlu0 1
    %510 = vperm.xlu0 %509, %v364
    %v511 = vpop.permute.xlu0 %510
    %513 = vset.pattern.permute.xlu0 1
    %514 = vperm.xlu0 %513, %v365
    %v515 = vpop.permute.xlu0 %514
    %517 = vset.pattern.permute.xlu0 1
    %518 = vperm.xlu0 %517, %v366
    %v519 = vpop.permute.xlu0 %518
    %521 = vset.pattern.permute.xlu0 1
    %522 = vperm.xlu0 %521, %v367
    %v523 = vpop.permute.xlu0 %522
    %525 = vset.pattern.permute.xlu0 1
    %526 = vperm.xlu0 %525, %v368
    %v527 = vpop.permute.xlu0 %526
    %529 = vset.pattern.permute.xlu0 1
    %530 = vperm.xlu0 %529, %v369
    %v531 = vpop.permute.xlu0 %530
    %533 = vset.pattern.permute.xlu0 1
    %534 = vperm.xlu0 %533, %v370
    %v535 = vpop.permute.xlu0 %534
    %537 = vset.pattern.permute.xlu0 1
    %538 = vperm.xlu0 %537, %v371
    %v539 = vpop.permute.xlu0 %538
    %541 = vset.pattern.permute.xlu0 1
    %542 = vperm.xlu0 %541, %v372
    %v543 = vpop.permute.xlu0 %542
    %545 = vset.pattern.permute.xlu0 1
    %546 = vperm.xlu0 %545, %v373
    %v547 = vpop.permute.xlu0 %546
    %549 = vset.pattern.permute.xlu0 1
    %550 = vperm.xlu0 %549, %v374
    %v551 = vpop.permute.xlu0 %550
    %553 = vset.pattern.permute.xlu0 1
    %554 = vperm.xlu0 %553, %v375
    %v555 = vpop.permute.xlu0 %554
    %557 = vset.pattern.permute.xlu0 1
    %558 = vperm.xlu0 %557, %v376
    %v559 = vpop.permute.xlu0 %558
    %561 = vset.pattern.permute.xlu0 1
    %562 = vperm.xlu0 %561, %v377
    %v563 = vpop.permute.xlu0 %562
    %565 = vset.pattern.permute.xlu0 1
    %566 = vperm.xlu0 %565, %v378
    %v567 = vpop.permute.xlu0 %566
    %569 = vset.pattern.permute.xlu0 1
    %570 = vperm.xlu0 %569, %v379
    %v571 = vpop.permute.xlu0 %570
    %v573 = vmul.f32 %v511, %v493
    %v574 = vmul.f32 %v515, %v494
    %v575 = vmul.f32 %v519, %v495
    %v576 = vmul.f32 %v523, %v496
    %v577 = vmul.f32 %v527, %v497
    %v578 = vmul.f32 %v531, %v498
    %v579 = vmul.f32 %v535, %v499
    %v580 = vmul.f32 %v539, %v500
    %v581 = vmul.f32 %v543, %v501
    %v582 = vmul.f32 %v547, %v502
    %v583 = vmul.f32 %v551, %v503
    %v584 = vmul.f32 %v555, %v504
    %v585 = vmul.f32 %v559, %v505
    %v586 = vmul.f32 %v563, %v506
    %v587 = vmul.f32 %v567, %v507
    %v588 = vmul.f32 %v571, %v508
    %s589 = scalar_lea.vmem %s2, 256
    %v590 = vld [vmem:[%s589] sm:$0xff]
    %v591 = vld [vmem:[%s589 + $0x8] sm:$0xff]
    %v592 = vld [vmem:[%s589 + $0x10] sm:$0xff]
    %v593 = vld [vmem:[%s589 + $0x18] sm:$0xff]
    %v594 = vld [vmem:[%s589 + $0x20] sm:$0xff]
    %v595 = vld [vmem:[%s589 + $0x28] sm:$0xff]
    %v596 = vld [vmem:[%s589 + $0x30] sm:$0xff]
    %v597 = vld [vmem:[%s589 + $0x38] sm:$0xff]
    %v598 = vld [vmem:[%s589 + $0x40] sm:$0xff]
    %v599 = vld [vmem:[%s589 + $0x48] sm:$0xff]
    %v600 = vld [vmem:[%s589 + $0x50] sm:$0xff]
    %v601 = vld [vmem:[%s589 + $0x58] sm:$0xff]
    %v602 = vld [vmem:[%s589 + $0x60] sm:$0xff]
    %v603 = vld [vmem:[%s589 + $0x68] sm:$0xff]
    %v604 = vld [vmem:[%s589 + $0x70] sm:$0xff]
    %v605 = vld [vmem:[%s589 + $0x78] sm:$0xff]
    %606 = vset.pattern.permute.xlu0 2
    %607 = vperm.xlu0 %606, %v364
    %v608 = vpop.permute.xlu0 %607
    %610 = vset.pattern.permute.xlu0 2
    %611 = vperm.xlu0 %610, %v365
    %v612 = vpop.permute.xlu0 %611
    %614 = vset.pattern.permute.xlu0 2
    %615 = vperm.xlu0 %614, %v366
    %v616 = vpop.permute.xlu0 %615
    %618 = vset.pattern.permute.xlu0 2
    %619 = vperm.xlu0 %618, %v367
    %v620 = vpop.permute.xlu0 %619
    %622 = vset.pattern.permute.xlu0 2
    %623 = vperm.xlu0 %622, %v368
    %v624 = vpop.permute.xlu0 %623
    %626 = vset.pattern.permute.xlu0 2
    %627 = vperm.xlu0 %626, %v369
    %v628 = vpop.permute.xlu0 %627
    %630 = vset.pattern.permute.xlu0 2
    %631 = vperm.xlu0 %630, %v370
    %v632 = vpop.permute.xlu0 %631
    %634 = vset.pattern.permute.xlu0 2
    %635 = vperm.xlu0 %634, %v371
    %v636 = vpop.permute.xlu0 %635
    %638 = vset.pattern.permute.xlu0 2
    %639 = vperm.xlu0 %638, %v372
    %v640 = vpop.permute.xlu0 %639
    %642 = vset.pattern.permute.xlu0 2
    %643 = vperm.xlu0 %642, %v373
    %v644 = vpop.permute.xlu0 %643
    %646 = vset.pattern.permute.xlu0 2
    %647 = vperm.xlu0 %646, %v374
    %v648 = vpop.permute.xlu0 %647
    %650 = vset.pattern.permute.xlu0 2
    %651 = vperm.xlu0 %650, %v375
    %v652 = vpop.permute.xlu0 %651
    %654 = vset.pattern.permute.xlu0 2
    %655 = vperm.xlu0 %654, %v376
    %v656 = vpop.permute.xlu0 %655
    %658 = vset.pattern.permute.xlu0 2
    %659 = vperm.xlu0 %658, %v377
    %v660 = vpop.permute.xlu0 %659
    %662 = vset.pattern.permute.xlu0 2
    %663 = vperm.xlu0 %662, %v378
    %v664 = vpop.permute.xlu0 %663
    %666 = vset.pattern.permute.xlu0 2
    %667 = vperm.xlu0 %666, %v379
    %v668 = vpop.permute.xlu0 %667
    %v670 = vmul.f32 %v608, %v590
    %v671 = vmul.f32 %v612, %v591
    %v672 = vmul.f32 %v616, %v592
    %v673 = vmul.f32 %v620, %v593
    %v674 = vmul.f32 %v624, %v594
    %v675 = vmul.f32 %v628, %v595
    %v676 = vmul.f32 %v632, %v596
    %v677 = vmul.f32 %v636, %v597
    %v678 = vmul.f32 %v640, %v598
    %v679 = vmul.f32 %v644, %v599
    %v680 = vmul.f32 %v648, %v600
    %v681 = vmul.f32 %v652, %v601
    %v682 = vmul.f32 %v656, %v602
    %v683 = vmul.f32 %v660, %v603
    %v684 = vmul.f32 %v664, %v604
    %v685 = vmul.f32 %v668, %v605
    %s686 = scalar_lea.vmem %s2, 384
    %v687 = vld [vmem:[%s686] sm:$0xff]
    %v688 = vld [vmem:[%s686 + $0x8] sm:$0xff]
    %v689 = vld [vmem:[%s686 + $0x10] sm:$0xff]
    %v690 = vld [vmem:[%s686 + $0x18] sm:$0xff]
    %v691 = vld [vmem:[%s686 + $0x20] sm:$0xff]
    %v692 = vld [vmem:[%s686 + $0x28] sm:$0xff]
    %v693 = vld [vmem:[%s686 + $0x30] sm:$0xff]
    %v694 = vld [vmem:[%s686 + $0x38] sm:$0xff]
    %v695 = vld [vmem:[%s686 + $0x40] sm:$0xff]
    %v696 = vld [vmem:[%s686 + $0x48] sm:$0xff]
    %v697 = vld [vmem:[%s686 + $0x50] sm:$0xff]
    %v698 = vld [vmem:[%s686 + $0x58] sm:$0xff]
    %v699 = vld [vmem:[%s686 + $0x60] sm:$0xff]
    %v700 = vld [vmem:[%s686 + $0x68] sm:$0xff]
    %v701 = vld [vmem:[%s686 + $0x70] sm:$0xff]
    %v702 = vld [vmem:[%s686 + $0x78] sm:$0xff]
    %703 = vset.pattern.permute.xlu0 3
    %704 = vperm.xlu0 %703, %v364
    %v705 = vpop.permute.xlu0 %704
    %707 = vset.pattern.permute.xlu0 3
    %708 = vperm.xlu0 %707, %v365
    %v709 = vpop.permute.xlu0 %708
    %711 = vset.pattern.permute.xlu0 3
    %712 = vperm.xlu0 %711, %v366
    %v713 = vpop.permute.xlu0 %712
    %715 = vset.pattern.permute.xlu0 3
    %716 = vperm.xlu0 %715, %v367
    %v717 = vpop.permute.xlu0 %716
    %719 = vset.pattern.permute.xlu0 3
    %720 = vperm.xlu0 %719, %v368
    %v721 = vpop.permute.xlu0 %720
    %723 = vset.pattern.permute.xlu0 3
    %724 = vperm.xlu0 %723, %v369
    %v725 = vpop.permute.xlu0 %724
    %727 = vset.pattern.permute.xlu0 3
    %728 = vperm.xlu0 %727, %v370
    %v729 = vpop.permute.xlu0 %728
    %731 = vset.pattern.permute.xlu0 3
    %732 = vperm.xlu0 %731, %v371
    %v733 = vpop.permute.xlu0 %732
    %735 = vset.pattern.permute.xlu0 3
    %736 = vperm.xlu0 %735, %v372
    %v737 = vpop.permute.xlu0 %736
    %739 = vset.pattern.permute.xlu0 3
    %740 = vperm.xlu0 %739, %v373
    %v741 = vpop.permute.xlu0 %740
    %743 = vset.pattern.permute.xlu0 3
    %744 = vperm.xlu0 %743, %v374
    %v745 = vpop.permute.xlu0 %744
    %747 = vset.pattern.permute.xlu0 3
    %748 = vperm.xlu0 %747, %v375
    %v749 = vpop.permute.xlu0 %748
    %751 = vset.pattern.permute.xlu0 3
    %752 = vperm.xlu0 %751, %v376
    %v753 = vpop.permute.xlu0 %752
    %755 = vset.pattern.permute.xlu0 3
    %756 = vperm.xlu0 %755, %v377
    %v757 = vpop.permute.xlu0 %756
    %759 = vset.pattern.permute.xlu0 3
    %760 = vperm.xlu0 %759, %v378
    %v761 = vpop.permute.xlu0 %760
    %763 = vset.pattern.permute.xlu0 3
    %764 = vperm.xlu0 %763, %v379
    %v765 = vpop.permute.xlu0 %764
    %v767 = vmul.f32 %v705, %v687
    %v768 = vmul.f32 %v709, %v688
    %v769 = vmul.f32 %v713, %v689
    %v770 = vmul.f32 %v717, %v690
    %v771 = vmul.f32 %v721, %v691
    %v772 = vmul.f32 %v725, %v692
    %v773 = vmul.f32 %v729, %v693
    %v774 = vmul.f32 %v733, %v694
    %v775 = vmul.f32 %v737, %v695
    %v776 = vmul.f32 %v741, %v696
    %v777 = vmul.f32 %v745, %v697
    %v778 = vmul.f32 %v749, %v698
    %v779 = vmul.f32 %v753, %v699
    %v780 = vmul.f32 %v757, %v700
    %v781 = vmul.f32 %v761, %v701
    %v782 = vmul.f32 %v765, %v702
    %s783 = scalar_lea.vmem %s2, 512
    %v784 = vld [vmem:[%s783] sm:$0xff]
    %v785 = vld [vmem:[%s783 + $0x8] sm:$0xff]
    %v786 = vld [vmem:[%s783 + $0x10] sm:$0xff]
    %v787 = vld [vmem:[%s783 + $0x18] sm:$0xff]
    %v788 = vld [vmem:[%s783 + $0x20] sm:$0xff]
    %v789 = vld [vmem:[%s783 + $0x28] sm:$0xff]
    %v790 = vld [vmem:[%s783 + $0x30] sm:$0xff]
    %v791 = vld [vmem:[%s783 + $0x38] sm:$0xff]
    %v792 = vld [vmem:[%s783 + $0x40] sm:$0xff]
    %v793 = vld [vmem:[%s783 + $0x48] sm:$0xff]
    %v794 = vld [vmem:[%s783 + $0x50] sm:$0xff]
    %v795 = vld [vmem:[%s783 + $0x58] sm:$0xff]
    %v796 = vld [vmem:[%s783 + $0x60] sm:$0xff]
    %v797 = vld [vmem:[%s783 + $0x68] sm:$0xff]
    %v798 = vld [vmem:[%s783 + $0x70] sm:$0xff]
    %v799 = vld [vmem:[%s783 + $0x78] sm:$0xff]
    %800 = vset.pattern.permute.xlu0 4
    %801 = vperm.xlu0 %800, %v364
    %v802 = vpop.permute.xlu0 %801
    %804 = vset.pattern.permute.xlu0 4
    %805 = vperm.xlu0 %804, %v365
    %v806 = vpop.permute.xlu0 %805
    %808 = vset.pattern.permute.xlu0 4
    %809 = vperm.xlu0 %808, %v366
    %v810 = vpop.permute.xlu0 %809
    %812 = vset.pattern.permute.xlu0 4
    %813 = vperm.xlu0 %812, %v367
    %v814 = vpop.permute.xlu0 %813
    %816 = vset.pattern.permute.xlu0 4
    %817 = vperm.xlu0 %816, %v368
    %v818 = vpop.permute.xlu0 %817
    %820 = vset.pattern.permute.xlu0 4
    %821 = vperm.xlu0 %820, %v369
    %v822 = vpop.permute.xlu0 %821
    %824 = vset.pattern.permute.xlu0 4
    %825 = vperm.xlu0 %824, %v370
    %v826 = vpop.permute.xlu0 %825
    %828 = vset.pattern.permute.xlu0 4
    %829 = vperm.xlu0 %828, %v371
    %v830 = vpop.permute.xlu0 %829
    %832 = vset.pattern.permute.xlu0 4
    %833 = vperm.xlu0 %832, %v372
    %v834 = vpop.permute.xlu0 %833
    %836 = vset.pattern.permute.xlu0 4
    %837 = vperm.xlu0 %836, %v373
    %v838 = vpop.permute.xlu0 %837
    %840 = vset.pattern.permute.xlu0 4
    %841 = vperm.xlu0 %840, %v374
    %v842 = vpop.permute.xlu0 %841
    %844 = vset.pattern.permute.xlu0 4
    %845 = vperm.xlu0 %844, %v375
    %v846 = vpop.permute.xlu0 %845
    %848 = vset.pattern.permute.xlu0 4
    %849 = vperm.xlu0 %848, %v376
    %v850 = vpop.permute.xlu0 %849
    %852 = vset.pattern.permute.xlu0 4
    %853 = vperm.xlu0 %852, %v377
    %v854 = vpop.permute.xlu0 %853
    %856 = vset.pattern.permute.xlu0 4
    %857 = vperm.xlu0 %856, %v378
    %v858 = vpop.permute.xlu0 %857
    %860 = vset.pattern.permute.xlu0 4
    %861 = vperm.xlu0 %860, %v379
    %v862 = vpop.permute.xlu0 %861
    %v864 = vmul.f32 %v802, %v784
    %v865 = vmul.f32 %v806, %v785
    %v866 = vmul.f32 %v810, %v786
    %v867 = vmul.f32 %v814, %v787
    %v868 = vmul.f32 %v818, %v788
    %v869 = vmul.f32 %v822, %v789
    %v870 = vmul.f32 %v826, %v790
    %v871 = vmul.f32 %v830, %v791
    %v872 = vmul.f32 %v834, %v792
    %v873 = vmul.f32 %v838, %v793
    %v874 = vmul.f32 %v842, %v794
    %v875 = vmul.f32 %v846, %v795
    %v876 = vmul.f32 %v850, %v796
    %v877 = vmul.f32 %v854, %v797
    %v878 = vmul.f32 %v858, %v798
    %v879 = vmul.f32 %v862, %v799
    %s880 = scalar_lea.vmem %s2, 640
    %v881 = vld [vmem:[%s880] sm:$0xff]
    %v882 = vld [vmem:[%s880 + $0x8] sm:$0xff]
    %v883 = vld [vmem:[%s880 + $0x10] sm:$0xff]
    %v884 = vld [vmem:[%s880 + $0x18] sm:$0xff]
    %v885 = vld [vmem:[%s880 + $0x20] sm:$0xff]
    %v886 = vld [vmem:[%s880 + $0x28] sm:$0xff]
    %v887 = vld [vmem:[%s880 + $0x30] sm:$0xff]
    %v888 = vld [vmem:[%s880 + $0x38] sm:$0xff]
    %v889 = vld [vmem:[%s880 + $0x40] sm:$0xff]
    %v890 = vld [vmem:[%s880 + $0x48] sm:$0xff]
    %v891 = vld [vmem:[%s880 + $0x50] sm:$0xff]
    %v892 = vld [vmem:[%s880 + $0x58] sm:$0xff]
    %v893 = vld [vmem:[%s880 + $0x60] sm:$0xff]
    %v894 = vld [vmem:[%s880 + $0x68] sm:$0xff]
    %v895 = vld [vmem:[%s880 + $0x70] sm:$0xff]
    %v896 = vld [vmem:[%s880 + $0x78] sm:$0xff]
    %897 = vset.pattern.permute.xlu0 5
    %898 = vperm.xlu0 %897, %v364
    %v899 = vpop.permute.xlu0 %898
    %901 = vset.pattern.permute.xlu0 5
    %902 = vperm.xlu0 %901, %v365
    %v903 = vpop.permute.xlu0 %902
    %905 = vset.pattern.permute.xlu0 5
    %906 = vperm.xlu0 %905, %v366
    %v907 = vpop.permute.xlu0 %906
    %909 = vset.pattern.permute.xlu0 5
    %910 = vperm.xlu0 %909, %v367
    %v911 = vpop.permute.xlu0 %910
    %913 = vset.pattern.permute.xlu0 5
    %914 = vperm.xlu0 %913, %v368
    %v915 = vpop.permute.xlu0 %914
    %917 = vset.pattern.permute.xlu0 5
    %918 = vperm.xlu0 %917, %v369
    %v919 = vpop.permute.xlu0 %918
    %921 = vset.pattern.permute.xlu0 5
    %922 = vperm.xlu0 %921, %v370
    %v923 = vpop.permute.xlu0 %922
    %925 = vset.pattern.permute.xlu0 5
    %926 = vperm.xlu0 %925, %v371
    %v927 = vpop.permute.xlu0 %926
    %929 = vset.pattern.permute.xlu0 5
    %930 = vperm.xlu0 %929, %v372
    %v931 = vpop.permute.xlu0 %930
    %933 = vset.pattern.permute.xlu0 5
    %934 = vperm.xlu0 %933, %v373
    %v935 = vpop.permute.xlu0 %934
    %937 = vset.pattern.permute.xlu0 5
    %938 = vperm.xlu0 %937, %v374
    %v939 = vpop.permute.xlu0 %938
    %941 = vset.pattern.permute.xlu0 5
    %942 = vperm.xlu0 %941, %v375
    %v943 = vpop.permute.xlu0 %942
    %945 = vset.pattern.permute.xlu0 5
    %946 = vperm.xlu0 %945, %v376
    %v947 = vpop.permute.xlu0 %946
    %949 = vset.pattern.permute.xlu0 5
    %950 = vperm.xlu0 %949, %v377
    %v951 = vpop.permute.xlu0 %950
    %953 = vset.pattern.permute.xlu0 5
    %954 = vperm.xlu0 %953, %v378
    %v955 = vpop.permute.xlu0 %954
    %957 = vset.pattern.permute.xlu0 5
    %958 = vperm.xlu0 %957, %v379
    %v959 = vpop.permute.xlu0 %958
    %v961 = vmul.f32 %v899, %v881
    %v962 = vmul.f32 %v903, %v882
    %v963 = vmul.f32 %v907, %v883
    %v964 = vmul.f32 %v911, %v884
    %v965 = vmul.f32 %v915, %v885
    %v966 = vmul.f32 %v919, %v886
    %v967 = vmul.f32 %v923, %v887
    %v968 = vmul.f32 %v927, %v888
    %v969 = vmul.f32 %v931, %v889
    %v970 = vmul.f32 %v935, %v890
    %v971 = vmul.f32 %v939, %v891
    %v972 = vmul.f32 %v943, %v892
    %v973 = vmul.f32 %v947, %v893
    %v974 = vmul.f32 %v951, %v894
    %v975 = vmul.f32 %v955, %v895
    %v976 = vmul.f32 %v959, %v896
    %s977 = scalar_lea.vmem %s2, 768
    %v978 = vld [vmem:[%s977] sm:$0xff]
    %v979 = vld [vmem:[%s977 + $0x8] sm:$0xff]
    %v980 = vld [vmem:[%s977 + $0x10] sm:$0xff]
    %v981 = vld [vmem:[%s977 + $0x18] sm:$0xff]
    %v982 = vld [vmem:[%s977 + $0x20] sm:$0xff]
    %v983 = vld [vmem:[%s977 + $0x28] sm:$0xff]
    %v984 = vld [vmem:[%s977 + $0x30] sm:$0xff]
    %v985 = vld [vmem:[%s977 + $0x38] sm:$0xff]
    %v986 = vld [vmem:[%s977 + $0x40] sm:$0xff]
    %v987 = vld [vmem:[%s977 + $0x48] sm:$0xff]
    %v988 = vld [vmem:[%s977 + $0x50] sm:$0xff]
    %v989 = vld [vmem:[%s977 + $0x58] sm:$0xff]
    %v990 = vld [vmem:[%s977 + $0x60] sm:$0xff]
    %v991 = vld [vmem:[%s977 + $0x68] sm:$0xff]
    %v992 = vld [vmem:[%s977 + $0x70] sm:$0xff]
    %v993 = vld [vmem:[%s977 + $0x78] sm:$0xff]
    %994 = vset.pattern.permute.xlu0 6
    %995 = vperm.xlu0 %994, %v364
    %v996 = vpop.permute.xlu0 %995
    %998 = vset.pattern.permute.xlu0 6
    %999 = vperm.xlu0 %998, %v365
    %v1000 = vpop.permute.xlu0 %999
    %1002 = vset.pattern.permute.xlu0 6
    %1003 = vperm.xlu0 %1002, %v366
    %v1004 = vpop.permute.xlu0 %1003
    %1006 = vset.pattern.permute.xlu0 6
    %1007 = vperm.xlu0 %1006, %v367
    %v1008 = vpop.permute.xlu0 %1007
    %1010 = vset.pattern.permute.xlu0 6
    %1011 = vperm.xlu0 %1010, %v368
    %v1012 = vpop.permute.xlu0 %1011
    %1014 = vset.pattern.permute.xlu0 6
    %1015 = vperm.xlu0 %1014, %v369
    %v1016 = vpop.permute.xlu0 %1015
    %1018 = vset.pattern.permute.xlu0 6
    %1019 = vperm.xlu0 %1018, %v370
    %v1020 = vpop.permute.xlu0 %1019
    %1022 = vset.pattern.permute.xlu0 6
    %1023 = vperm.xlu0 %1022, %v371
    %v1024 = vpop.permute.xlu0 %1023
    %1026 = vset.pattern.permute.xlu0 6
    %1027 = vperm.xlu0 %1026, %v372
    %v1028 = vpop.permute.xlu0 %1027
    %1030 = vset.pattern.permute.xlu0 6
    %1031 = vperm.xlu0 %1030, %v373
    %v1032 = vpop.permute.xlu0 %1031
    %1034 = vset.pattern.permute.xlu0 6
    %1035 = vperm.xlu0 %1034, %v374
    %v1036 = vpop.permute.xlu0 %1035
    %1038 = vset.pattern.permute.xlu0 6
    %1039 = vperm.xlu0 %1038, %v375
    %v1040 = vpop.permute.xlu0 %1039
    %1042 = vset.pattern.permute.xlu0 6
    %1043 = vperm.xlu0 %1042, %v376
    %v1044 = vpop.permute.xlu0 %1043
    %1046 = vset.pattern.permute.xlu0 6
    %1047 = vperm.xlu0 %1046, %v377
    %v1048 = vpop.permute.xlu0 %1047
    %1050 = vset.pattern.permute.xlu0 6
    %1051 = vperm.xlu0 %1050, %v378
    %v1052 = vpop.permute.xlu0 %1051
    %1054 = vset.pattern.permute.xlu0 6
    %1055 = vperm.xlu0 %1054, %v379
    %v1056 = vpop.permute.xlu0 %1055
    %v1058 = vmul.f32 %v996, %v978
    %v1059 = vmul.f32 %v1000, %v979
    %v1060 = vmul.f32 %v1004, %v980
    %v1061 = vmul.f32 %v1008, %v981
    %v1062 = vmul.f32 %v1012, %v982
    %v1063 = vmul.f32 %v1016, %v983
    %v1064 = vmul.f32 %v1020, %v984
    %v1065 = vmul.f32 %v1024, %v985
    %v1066 = vmul.f32 %v1028, %v986
    %v1067 = vmul.f32 %v1032, %v987
    %v1068 = vmul.f32 %v1036, %v988
    %v1069 = vmul.f32 %v1040, %v989
    %v1070 = vmul.f32 %v1044, %v990
    %v1071 = vmul.f32 %v1048, %v991
    %v1072 = vmul.f32 %v1052, %v992
    %v1073 = vmul.f32 %v1056, %v993
    %s1074 = scalar_lea.vmem %s2, 896
    %v1075 = vld [vmem:[%s1074] sm:$0xff]
    %v1076 = vld [vmem:[%s1074 + $0x8] sm:$0xff]
    %v1077 = vld [vmem:[%s1074 + $0x10] sm:$0xff]
    %v1078 = vld [vmem:[%s1074 + $0x18] sm:$0xff]
    %v1079 = vld [vmem:[%s1074 + $0x20] sm:$0xff]
    %v1080 = vld [vmem:[%s1074 + $0x28] sm:$0xff]
    %v1081 = vld [vmem:[%s1074 + $0x30] sm:$0xff]
    %v1082 = vld [vmem:[%s1074 + $0x38] sm:$0xff]
    %v1083 = vld [vmem:[%s1074 + $0x40] sm:$0xff]
    %v1084 = vld [vmem:[%s1074 + $0x48] sm:$0xff]
    %v1085 = vld [vmem:[%s1074 + $0x50] sm:$0xff]
    %v1086 = vld [vmem:[%s1074 + $0x58] sm:$0xff]
    %v1087 = vld [vmem:[%s1074 + $0x60] sm:$0xff]
    %v1088 = vld [vmem:[%s1074 + $0x68] sm:$0xff]
    %v1089 = vld [vmem:[%s1074 + $0x70] sm:$0xff]
    %v1090 = vld [vmem:[%s1074 + $0x78] sm:$0xff]
    %1091 = vset.pattern.permute.xlu0 7
    %1092 = vperm.xlu0 %1091, %v364
    %v1093 = vpop.permute.xlu0 %1092
    %1095 = vset.pattern.permute.xlu0 7
    %1096 = vperm.xlu0 %1095, %v365
    %v1097 = vpop.permute.xlu0 %1096
    %1099 = vset.pattern.permute.xlu0 7
    %1100 = vperm.xlu0 %1099, %v366
    %v1101 = vpop.permute.xlu0 %1100
    %1103 = vset.pattern.permute.xlu0 7
    %1104 = vperm.xlu0 %1103, %v367
    %v1105 = vpop.permute.xlu0 %1104
    %1107 = vset.pattern.permute.xlu0 7
    %1108 = vperm.xlu0 %1107, %v368
    %v1109 = vpop.permute.xlu0 %1108
    %1111 = vset.pattern.permute.xlu0 7
    %1112 = vperm.xlu0 %1111, %v369
    %v1113 = vpop.permute.xlu0 %1112
    %1115 = vset.pattern.permute.xlu0 7
    %1116 = vperm.xlu0 %1115, %v370
    %v1117 = vpop.permute.xlu0 %1116
    %1119 = vset.pattern.permute.xlu0 7
    %1120 = vperm.xlu0 %1119, %v371
    %v1121 = vpop.permute.xlu0 %1120
    %1123 = vset.pattern.permute.xlu0 7
    %1124 = vperm.xlu0 %1123, %v372
    %v1125 = vpop.permute.xlu0 %1124
    %1127 = vset.pattern.permute.xlu0 7
    %1128 = vperm.xlu0 %1127, %v373
    %v1129 = vpop.permute.xlu0 %1128
    %1131 = vset.pattern.permute.xlu0 7
    %1132 = vperm.xlu0 %1131, %v374
    %v1133 = vpop.permute.xlu0 %1132
    %1135 = vset.pattern.permute.xlu0 7
    %1136 = vperm.xlu0 %1135, %v375
    %v1137 = vpop.permute.xlu0 %1136
    %1139 = vset.pattern.permute.xlu0 7
    %1140 = vperm.xlu0 %1139, %v376
    %v1141 = vpop.permute.xlu0 %1140
    %1143 = vset.pattern.permute.xlu0 7
    %1144 = vperm.xlu0 %1143, %v377
    %v1145 = vpop.permute.xlu0 %1144
    %1147 = vset.pattern.permute.xlu0 7
    %1148 = vperm.xlu0 %1147, %v378
    %v1149 = vpop.permute.xlu0 %1148
    %1151 = vset.pattern.permute.xlu0 7
    %1152 = vperm.xlu0 %1151, %v379
    %v1153 = vpop.permute.xlu0 %1152
    %v1155 = vmul.f32 %v1093, %v1075
    %v1156 = vmul.f32 %v1097, %v1076
    %v1157 = vmul.f32 %v1101, %v1077
    %v1158 = vmul.f32 %v1105, %v1078
    %v1159 = vmul.f32 %v1109, %v1079
    %v1160 = vmul.f32 %v1113, %v1080
    %v1161 = vmul.f32 %v1117, %v1081
    %v1162 = vmul.f32 %v1121, %v1082
    %v1163 = vmul.f32 %v1125, %v1083
    %v1164 = vmul.f32 %v1129, %v1084
    %v1165 = vmul.f32 %v1133, %v1085
    %v1166 = vmul.f32 %v1137, %v1086
    %v1167 = vmul.f32 %v1141, %v1087
    %v1168 = vmul.f32 %v1145, %v1088
    %v1169 = vmul.f32 %v1149, %v1089
    %v1170 = vmul.f32 %v1153, %v1090
    %v1171 = vadd.f32 %v476, %v573
    %v1172 = vadd.f32 %v477, %v574
    %v1173 = vadd.f32 %v478, %v575
    %v1174 = vadd.f32 %v479, %v576
    %v1175 = vadd.f32 %v480, %v577
    %v1176 = vadd.f32 %v481, %v578
    %v1177 = vadd.f32 %v482, %v579
    %v1178 = vadd.f32 %v483, %v580
    %v1179 = vadd.f32 %v484, %v581
    %v1180 = vadd.f32 %v485, %v582
    %v1181 = vadd.f32 %v486, %v583
    %v1182 = vadd.f32 %v487, %v584
    %v1183 = vadd.f32 %v488, %v585
    %v1184 = vadd.f32 %v489, %v586
    %v1185 = vadd.f32 %v490, %v587
    %v1186 = vadd.f32 %v491, %v588
    %v1187 = vadd.f32 %v670, %v767
    %v1188 = vadd.f32 %v671, %v768
    %v1189 = vadd.f32 %v672, %v769
    %v1190 = vadd.f32 %v673, %v770
    %v1191 = vadd.f32 %v674, %v771
    %v1192 = vadd.f32 %v675, %v772
    %v1193 = vadd.f32 %v676, %v773
    %v1194 = vadd.f32 %v677, %v774
    %v1195 = vadd.f32 %v678, %v775
    %v1196 = vadd.f32 %v679, %v776
    %v1197 = vadd.f32 %v680, %v777
    %v1198 = vadd.f32 %v681, %v778
    %v1199 = vadd.f32 %v682, %v779
    %v1200 = vadd.f32 %v683, %v780
    %v1201 = vadd.f32 %v684, %v781
    %v1202 = vadd.f32 %v685, %v782
    %v1203 = vadd.f32 %v864, %v961
    %v1204 = vadd.f32 %v865, %v962
    %v1205 = vadd.f32 %v866, %v963
    %v1206 = vadd.f32 %v867, %v964
    %v1207 = vadd.f32 %v868, %v965
    %v1208 = vadd.f32 %v869, %v966
    %v1209 = vadd.f32 %v870, %v967
    %v1210 = vadd.f32 %v871, %v968
    %v1211 = vadd.f32 %v872, %v969
    %v1212 = vadd.f32 %v873, %v970
    %v1213 = vadd.f32 %v874, %v971
    %v1214 = vadd.f32 %v875, %v972
    %v1215 = vadd.f32 %v876, %v973
    %v1216 = vadd.f32 %v877, %v974
    %v1217 = vadd.f32 %v878, %v975
    %v1218 = vadd.f32 %v879, %v976
    %v1219 = vadd.f32 %v1058, %v1155
    %v1220 = vadd.f32 %v1059, %v1156
    %v1221 = vadd.f32 %v1060, %v1157
    %v1222 = vadd.f32 %v1061, %v1158
    %v1223 = vadd.f32 %v1062, %v1159
    %v1224 = vadd.f32 %v1063, %v1160
    %v1225 = vadd.f32 %v1064, %v1161
    %v1226 = vadd.f32 %v1065, %v1162
    %v1227 = vadd.f32 %v1066, %v1163
    %v1228 = vadd.f32 %v1067, %v1164
    %v1229 = vadd.f32 %v1068, %v1165
    %v1230 = vadd.f32 %v1069, %v1166
    %v1231 = vadd.f32 %v1070, %v1167
    %v1232 = vadd.f32 %v1071, %v1168
    %v1233 = vadd.f32 %v1072, %v1169
    %v1234 = vadd.f32 %v1073, %v1170
    %v1235 = vadd.f32 %v1171, %v1187
    %v1236 = vadd.f32 %v1172, %v1188
    %v1237 = vadd.f32 %v1173, %v1189
    %v1238 = vadd.f32 %v1174, %v1190
    %v1239 = vadd.f32 %v1175, %v1191
    %v1240 = vadd.f32 %v1176, %v1192
    %v1241 = vadd.f32 %v1177, %v1193
    %v1242 = vadd.f32 %v1178, %v1194
    %v1243 = vadd.f32 %v1179, %v1195
    %v1244 = vadd.f32 %v1180, %v1196
    %v1245 = vadd.f32 %v1181, %v1197
    %v1246 = vadd.f32 %v1182, %v1198
    %v1247 = vadd.f32 %v1183, %v1199
    %v1248 = vadd.f32 %v1184, %v1200
    %v1249 = vadd.f32 %v1185, %v1201
    %v1250 = vadd.f32 %v1186, %v1202
    %v1251 = vadd.f32 %v1203, %v1219
    %v1252 = vadd.f32 %v1204, %v1220
    %v1253 = vadd.f32 %v1205, %v1221
    %v1254 = vadd.f32 %v1206, %v1222
    %v1255 = vadd.f32 %v1207, %v1223
    %v1256 = vadd.f32 %v1208, %v1224
    %v1257 = vadd.f32 %v1209, %v1225
    %v1258 = vadd.f32 %v1210, %v1226
    %v1259 = vadd.f32 %v1211, %v1227
    %v1260 = vadd.f32 %v1212, %v1228
    %v1261 = vadd.f32 %v1213, %v1229
    %v1262 = vadd.f32 %v1214, %v1230
    %v1263 = vadd.f32 %v1215, %v1231
    %v1264 = vadd.f32 %v1216, %v1232
    %v1265 = vadd.f32 %v1217, %v1233
    %v1266 = vadd.f32 %v1218, %v1234
    %v1267 = vadd.f32 %v1235, %v1251
    %v1268 = vadd.f32 %v1236, %v1252
    %v1269 = vadd.f32 %v1237, %v1253
    %v1270 = vadd.f32 %v1238, %v1254
    %v1271 = vadd.f32 %v1239, %v1255
    %v1272 = vadd.f32 %v1240, %v1256
    %v1273 = vadd.f32 %v1241, %v1257
    %v1274 = vadd.f32 %v1242, %v1258
    %v1275 = vadd.f32 %v1243, %v1259
    %v1276 = vadd.f32 %v1244, %v1260
    %v1277 = vadd.f32 %v1245, %v1261
    %v1278 = vadd.f32 %v1246, %v1262
    %v1279 = vadd.f32 %v1247, %v1263
    %v1280 = vadd.f32 %v1248, %v1264
    %v1281 = vadd.f32 %v1249, %v1265
    %v1282 = vadd.f32 %v1250, %v1266
    %v1283 = vld [vmem:[%s4] sm:$0x3]
    %v1284 = vld [vmem:[%s3] sm:$0x1]
    %v1286 = vperm.slane %v1284, 0
    %1288 = vmatpush.msra.mxu0 %v1282
    %1289 = vmatpush.msra.mxu0 %v1281
    %1290 = vmatpush.msra.mxu0 %v1280
    %1291 = vmatpush.msra.mxu0 %v1279
    %1292 = vmatpush.msra.mxu0 %v1278
    %1293 = vmatpush.msra.mxu0 %v1277
    %1294 = vmatpush.msra.mxu0 %v1276
    %1295 = vmatpush.msra.mxu0 %v1275
    %1296 = vmatpush.msra.mxu0 %v1274
    %1297 = vmatpush.msra.mxu0 %v1273
    %1298 = vmatpush.msra.mxu0 %v1272
    %1299 = vmatpush.msra.mxu0 %v1271
    %1300 = vmatpush.msra.mxu0 %v1270
    %1301 = vmatpush.msra.mxu0 %v1269
    %1302 = vmatpush.msra.mxu0 %v1268
    %1303 = vmatpush.msra.mxu0 %v1267
    %1304 = vmatmul.f32.gmra.mxu0 %v1283
    %v1305 = vpop.f32.mrf.mxu0
    %v1306 = vadd.f32 %v1286, %v1305
    %1307 = vdwg.mxu0
    %v1308 = vmax.f32 %v1306, 0.0
    %v1309 = vld [vmem:[%s5] sm:$0xff]
    %v1310 = vld [vmem:[%s5 + $0x8] sm:$0xff]
    %v1311 = vld [vmem:[%s5 + $0x10] sm:$0xff]
    %v1312 = vld [vmem:[%s5 + $0x18] sm:$0xff]
    %v1313 = vld [vmem:[%s6] sm:$0x1]
    %v1315 = vperm.slane %v1313, 0
    %vm1317 = vcmask 261120
    %v1319 = vsel %vm1317, %v1308, 0
    %1321 = vmatpush.msra.mxu0 0.0
    %1322 = vmatpush.msra.mxu0 0.0
    %1323 = vmatpush.msra.mxu0 0.0
    %1324 = vmatpush.msra.mxu0 0.0
    %1325 = vmatpush.msra.mxu0 0.0
    %1326 = vmatpush.msra.mxu0 0.0
    %1327 = vmatpush.msra.mxu0 0.0
    %1328 = vmatpush.msra.mxu0 0.0
    %1329 = vmatpush.msra.mxu0 0.0
    %1330 = vmatpush.msra.mxu0 0.0
    %1331 = vmatpush.msra.mxu0 0.0
    %1332 = vmatpush.msra.mxu0 0.0
    %1333 = vmatpush.msra.mxu0 %v1312
    %1334 = vmatpush.msra.mxu0 %v1311
    %1335 = vmatpush.msra.mxu0 %v1310
    %1336 = vmatpush.msra.mxu0 %v1309
    %1337 = vmatmul.f32.gmra.mxu0 %v1319
    %v1338 = vpop.f32.mrf.mxu0
    %v1339 = vadd.f32 %v1315, %v1338
    %1340 = vdwg.mxu0
    %vm1341 = vcmask 74752
    %1342 = vst.msk [vmem:[#allocation2] sm:$0x3] %vm1341, %v1339
    // Predicated region
    $region30: #{forward.1} parent=1 // pred_check
      _
    $region31: #{forward.1} parent=1 // pred_check_branch
      %1344 = sbr.rel (0) target = $region33
    $region32: #{forward.1} parent=1 // pred_region
      %1346 = vsyncadd [#allocation3], 0
      %s1348 = sshll.u32 [#allocation2], 4
      %s1349 = int_to_ptr.vmem [resolvable:$true] %s1348
      %s1350 = sshll.u32 %s7, 4
      %s1351 = int_to_ptr.hbm [resolvable:$true] %s1350
      %1353 = dma.vmem_to_hbm [thread:$0]  %s1349, 32, %s1351, [#allocation3]
    $region33: #{forward.1} parent=1 // pred_fallthru
      _
    // Predicated region
    $region34: #{forward.1} parent=1 // pred_check
      _
    $region35: #{forward.1} parent=1 // pred_check_branch
      %1355 = sbr.rel (0) target = $region37
    $region36: #{forward.1} parent=1 // pred_region
      %1357 = dma.done [#allocation3], 32
    $region37: #{forward.1} parent=1 // pred_fallthru
      _
    %1358 = vsyncpa [#allocation3], 1

</llo_original>
